<compile_context>
chip_gen: v6e
topology: v6e:2x2x1
jax: 0.10.0
libtpu: 0.0.40
codegen_flags: <defaults>
</compile_context>

<pallas_src>
import functools

import jax
import jax.numpy as jnp
from jax import lax
from jax.experimental import pallas as pl
from jax.experimental.pallas import tpu as pltpu


# GaussActivation / MaskUpdate constants (module defaults; the in-forward clamps
# of GaussActivation leave these values unchanged).
GAUSS_A = 1.1
GAUSS_MU = 2.0
GAUSS_SIGMA1 = 1.0
GAUSS_SIGMA2 = 1.0    # == SIGMA1 -> the kernel shares one transcendental
MASK_ALPHA = 0.8


def _pick_tile(P, halo_blk):
    """Lane-tile size: multiple of max(halo_blk, 128), capped at 2048, and small
    enough to keep >= ~6 grid steps so both v7x TensorCores get work."""
    base = max(halo_blk, 128)
    target = max(base, min(2048, P // 6))
    return max(base, (target // base) * base)


@functools.partial(jax.jit, static_argnames=("kernel_size", "stride", "padding"))
def forward_attention_layer(input_features, input_masks, w_conv, w_mask,
                            kernel_size, stride, padding):
    """Pallas implementation of ForwardAttentionLayer.forward.

    input_features: (B, C_in, H, W) f32   input_masks: (B, C_mask, H, W) f32
    w_conv: (C_out, C_in, k, k) f32       w_mask: (C_out, C_mask, k, k) f32
    Returns (convOut, maskUpdate, convFeatures, maskActiv), each (B, C_out, Ho, Wo).
    """
    B, C_in, H, W = input_features.shape
    C_mask = input_masks.shape[1]
    C_out = w_conv.shape[0]
    k = kernel_size

    Hp, Wp = H + 2 * padding, W + 2 * padding
    Ho = (H + 2 * padding - k) // stride + 1
    Wo = (W + 2 * padding - k) // stride + 1

    C_tot = C_in + C_mask
    C_pad = ((C_tot + 7) // 8) * 8           # sublane-align the channel axis
    P = B * Hp * Wp                          # flattened padded pixel count

    halo = (k - 1) * (Wp + 1)                # max stencil offset in flattened coords
    HALO_BLK = 128 * ((halo + 127) // 128)   # halo block, lane-aligned
    tm = _pick_tile(P, HALO_BLK)             # lane tile per grid step
    n_tiles = (P + tm - 1) // tm
    P_out = n_tiles * tm
    P_in = (n_tiles + 1) * tm                # covers the last tile's halo read

    # ---- pack inputs: (C_pad, P_in); rows 0..C_in-1 = features, then masks ----
    # NOTE: bf16 casting of this stream (feedback item) is left off to keep exact
    # f32 numerics against the reference.
    xp = jnp.pad(input_features, ((0, 0), (0, 0), (padding, padding), (padding, padding)))
    mp = jnp.pad(input_masks, ((0, 0), (0, 0), (padding, padding), (padding, padding)))
    comb = jnp.concatenate([xp, mp], axis=1)                     # (B, C_tot, Hp, Wp)
    comb = jnp.transpose(comb, (1, 0, 2, 3)).reshape(C_tot, P)   # pixels on lane axis
    comb = jnp.pad(comb, ((0, C_pad - C_tot), (0, P_in - P)))    # (C_pad, P_in)
    comb = comb.astype(jnp.float32)

    # ---- fused block-diagonal weight: ONE matmul does conv + maskConv ----
    # column index = offset_index * C_pad + channel ; rows 0..C_out-1 = conv,
    # rows C_out..2*C_out-1 = maskConv (zeros elsewhere).
    Kc = k * k * C_pad
    wc_t = jnp.transpose(w_conv, (0, 2, 3, 1)).reshape(C_out, k * k, C_in)
    wm_t = jnp.transpose(w_mask, (0, 2, 3, 1)).reshape(C_out, k * k, C_mask)
    wcomb = jnp.zeros((2 * C_out, k * k, C_pad), jnp.float32)
    wcomb = wcomb.at[:C_out, :, :C_in].set(wc_t.astype(jnp.float32))
    wcomb = wcomb.at[C_out:, :, C_in:C_tot].set(wm_t.astype(jnp.float32))
    wcomb = wcomb.reshape(2 * C_out, Kc)

    # static stencil offsets in flattened (row-major padded) pixel coordinates
    offsets = tuple(di * Wp + dj for di in range(k) for dj in range(k))

    def kernel(x_ref, halo_ref, w_ref,
               conv_out_ref, mask_upd_ref, conv_feat_ref, mask_activ_ref):
        # tile + halo of the packed input; pixels on the 128-lane axis
        full = jnp.concatenate([x_ref[...], halo_ref[...]], axis=1)  # (C_pad, tm+HALO)

        # fused im2col in VMEM: k*k shifted slices stacked along K
        patches = jnp.concatenate([full[:, o:o + tm] for o in offsets], axis=0)

        # single MXU matmul for BOTH convolutions -> (2*C_out, tm)
        res = jnp.dot(w_ref[...], patches, preferred_element_type=jnp.float32)
        conv_feat = res[:C_out, :]
        mask_feat = res[C_out:, :]

        # GaussActivation: sigma1 == sigma2 -> one exp (EUP), one select (VPU)
        d = mask_feat - GAUSS_MU
        e = jnp.exp(-GAUSS_SIGMA1 * d * d)
        mask_activ = jnp.where(mask_feat < GAUSS_MU,
                               GAUSS_A * e,
                               1.0 + (GAUSS_A - 1.0) * e)

        conv_out = conv_feat * mask_activ

        # MaskUpdate: relu(x) ** 0.8, exact 0 at 0 (no NaN/inf)
        r = jnp.maximum(mask_feat, 0.0)
        pos = r > 0.0
        mask_upd = jnp.where(pos,
                             jnp.exp(MASK_ALPHA * jnp.log(jnp.where(pos, r, 1.0))),
                             0.0)

        conv_out_ref[...] = conv_out
        mask_upd_ref[...] = mask_upd
        conv_feat_ref[...] = conv_feat
        mask_activ_ref[...] = mask_activ

    out_shape = tuple(jax.ShapeDtypeStruct((C_out, P_out), jnp.float32) for _ in range(4))
    out_spec = pl.BlockSpec((C_out, tm), lambda i: (0, i))
    halo_stride = tm // HALO_BLK   # tm is a multiple of HALO_BLK by construction

    outs = pl.pallas_call(
        kernel,
        out_shape=out_shape,
        grid=(n_tiles,),
        in_specs=[
            pl.BlockSpec((C_pad, tm), lambda i: (0, i)),                       # tile
            pl.BlockSpec((C_pad, HALO_BLK), lambda i: (0, (i + 1) * halo_stride)),  # halo
            pl.BlockSpec((2 * C_out, Kc), lambda i: (0, 0)),                   # weights (resident)
        ],
        out_specs=(out_spec, out_spec, out_spec, out_spec),
        compiler_params=pltpu.CompilerParams(
            dimension_semantics=("parallel",),
            vmem_limit_bytes=32 * 1024 * 1024,   # safe on v5e/v6e (128 MiB) and v7x (64 MiB)
        ),
    )(comb, comb, wcomb)   # same packed array feeds both the tile and halo specs

    def unpack(y):
        y = y[:, :P].reshape(C_out, B, Hp, Wp)
        y = y[:, :, ::stride, ::stride][:, :, :Ho, :Wo]
        return jnp.transpose(y, (1, 0, 2, 3))   # (B, C_out, Ho, Wo), NCHW like PyTorch

    # TODO(synk): a consumer accepting the (C_out, pixels) layout directly could skip
    # this transpose and save one HBM round trip over the four outputs.
    return tuple(unpack(y) for y in outs)


def _reference(input_features, input_masks, w_conv, w_mask, stride, padding):
    """Plain-JAX reference mirroring the PyTorch forward."""
    dn = lax.conv_dimension_numbers(input_features.shape, w_conv.shape,
                                    ("NCHW", "OIHW", "NCHW"))
    conv_feat = lax.conv_general_dilated(
        input_features, w_conv, (stride, stride),
        [(padding, padding), (padding, padding)], dimension_numbers=dn)
    dn_m = lax.conv_dimension_numbers(input_masks.shape, w_mask.shape,
                                      ("NCHW", "OIHW", "NCHW"))
    mask_feat = lax.conv_general_dilated(
        input_masks, w_mask, (stride, stride),
        [(padding, padding), (padding, padding)], dimension_numbers=dn_m)

    d = mask_feat - GAUSS_MU
    left = jnp.where(mask_feat < GAUSS_MU, GAUSS_A * jnp.exp(-GAUSS_SIGMA1 * d * d), 0.0)
    right = jnp.where(mask_feat >= GAUSS_MU,
                      1.0 + (GAUSS_A - 1.0) * jnp.exp(-GAUSS_SIGMA2 * d * d), 0.0)
    mask_activ = left + right
    conv_out = conv_feat * mask_activ
    mask_upd = jnp.power(jnp.maximum(mask_feat, 0.0), MASK_ALPHA)
    return conv_out, mask_upd, conv_feat, mask_activ


if __name__ == "__main__":
    # ForwardAttentionLayer(inputChannels=4, outputChannels=8, kernelSize=3,
    #                       stride=1, padding=1, bias=False)
    # inputChannels == 4  ->  maskConv takes 3-channel masks.
    B, C_in, H, W = 2, 4, 16, 16
    C_mask, C_out, K = 3, 8, 3
    stride, padding = 1, 1

    key = jax.random.PRNGKey(0)
    k_x, k_m, k_wc, k_wm = jax.random.split(key, 4)

    x = jax.random.normal(k_x, (B, C_in, H, W), dtype=jnp.float32)
    masks = jax.random.uniform(k_m, (B, C_mask, H, W), dtype=jnp.float32)

    # weights_init('gaussian'): N(0, 0.02); bias=False
    w_conv = 0.02 * jax.random.normal(k_wc, (C_out, C_in, K, K), dtype=jnp.float32)
    w_mask = 0.02 * jax.random.normal(k_wm, (C_out, C_mask, K, K), dtype=jnp.float32)

    outs = forward_attention_layer(x, masks, w_conv, w_mask,
                                   kernel_size=K, stride=stride, padding=padding)
    outs = jax.block_until_ready(outs)

    refs = _reference(x, masks, w_conv, w_mask, stride, padding)
    for o, r in zip(outs, refs):
        assert o.shape == r.shape, (o.shape, r.shape)
        err = float(jnp.max(jnp.abs(o - r)))
        assert jnp.allclose(o, r, atol=1e-4, rtol=1e-4), err

    print("KERNEL_OK")
</pallas_src>

<mosaic_0001>
module attributes {stable_mosaic.version = 11 : i64} {
  func.func @kernel(%arg0: i32, %arg1: memref<8x128xf32, #tpu.memory_space<vmem>>, %arg2: memref<8x128xf32, #tpu.memory_space<vmem>>, %arg3: memref<16x72xf32, #tpu.memory_space<vmem>>, %arg4: memref<8x128xf32, #tpu.memory_space<vmem>>, %arg5: memref<8x128xf32, #tpu.memory_space<vmem>>, %arg6: memref<8x128xf32, #tpu.memory_space<vmem>>, %arg7: memref<8x128xf32, #tpu.memory_space<vmem>>) attributes {dimension_semantics = [#tpu.dimension_semantics<parallel>], iteration_bounds = array<i64: 6>, scalar_prefetch = 0 : i64, scratch_operands = 0 : i64, tpu.core_type = #tpu.core_type<tc>, window_params = [{transform_indices = @transform_0, window_bounds = array<i64: 8, 128>}, {transform_indices = @transform_1, window_bounds = array<i64: 8, 128>}, {pipeline_mode = #tpu.pipeline_mode<synchronous>, transform_indices = @transform_2, window_bounds = array<i64: 16, 72>}, {transform_indices = @transform_3, window_bounds = array<i64: 8, 128>}, {transform_indices = @transform_4, window_bounds = array<i64: 8, 128>}, {transform_indices = @transform_5, window_bounds = array<i64: 8, 128>}, {transform_indices = @transform_6, window_bounds = array<i64: 8, 128>}]} {
    %c0 = arith.constant 0 : index
    %c0_0 = arith.constant 0 : index
    %0 = vector.load %arg1[%c0, %c0_0] : memref<8x128xf32, #tpu.memory_space<vmem>>, vector<8x128xf32>
    %c0_1 = arith.constant 0 : index
    %c0_2 = arith.constant 0 : index
    %1 = vector.load %arg2[%c0_1, %c0_2] : memref<8x128xf32, #tpu.memory_space<vmem>>, vector<8x128xf32>
    %2 = tpu.concatenate %0, %1 in 1 : vector<8x128xf32>, vector<8x128xf32> -> vector<8x256xf32>
    %3 = vector.extract_strided_slice %2 {offsets = [0, 0], sizes = [8, 128], strides = [1, 1]} : vector<8x256xf32> to vector<8x128xf32>
    %4 = vector.extract_strided_slice %2 {offsets = [0, 1], sizes = [8, 128], strides = [1, 1]} : vector<8x256xf32> to vector<8x128xf32>
    %5 = vector.extract_strided_slice %2 {offsets = [0, 2], sizes = [8, 128], strides = [1, 1]} : vector<8x256xf32> to vector<8x128xf32>
    %6 = vector.extract_strided_slice %2 {offsets = [0, 18], sizes = [8, 128], strides = [1, 1]} : vector<8x256xf32> to vector<8x128xf32>
    %7 = vector.extract_strided_slice %2 {offsets = [0, 19], sizes = [8, 128], strides = [1, 1]} : vector<8x256xf32> to vector<8x128xf32>
    %8 = vector.extract_strided_slice %2 {offsets = [0, 20], sizes = [8, 128], strides = [1, 1]} : vector<8x256xf32> to vector<8x128xf32>
    %9 = vector.extract_strided_slice %2 {offsets = [0, 36], sizes = [8, 128], strides = [1, 1]} : vector<8x256xf32> to vector<8x128xf32>
    %10 = vector.extract_strided_slice %2 {offsets = [0, 37], sizes = [8, 128], strides = [1, 1]} : vector<8x256xf32> to vector<8x128xf32>
    %11 = vector.extract_strided_slice %2 {offsets = [0, 38], sizes = [8, 128], strides = [1, 1]} : vector<8x256xf32> to vector<8x128xf32>
    %12 = tpu.concatenate %3, %4, %5, %6, %7, %8, %9, %10, %11 in 0 : vector<8x128xf32>, vector<8x128xf32>, vector<8x128xf32>, vector<8x128xf32>, vector<8x128xf32>, vector<8x128xf32>, vector<8x128xf32>, vector<8x128xf32>, vector<8x128xf32> -> vector<72x128xf32>
    %c0_3 = arith.constant 0 : index
    %c0_4 = arith.constant 0 : index
    %13 = vector.load %arg3[%c0_3, %c0_4] : memref<16x72xf32, #tpu.memory_space<vmem>>, vector<16x72xf32>
    %cst = arith.constant dense<0.000000e+00> : vector<16x128xf32>
    %14 = tpu.matmul %13, %12, %cst {dimension_numbers = #tpu.dot_dimension_numbers<[1], [0], [0], [1], [0, 0, 1, 1], [], []>} : vector<16x72xf32>, vector<72x128xf32>, vector<16x128xf32> -> vector<16x128xf32>
    %15 = vector.extract_strided_slice %14 {offsets = [0, 0], sizes = [8, 128], strides = [1, 1]} : vector<16x128xf32> to vector<8x128xf32>
    %16 = vector.extract_strided_slice %14 {offsets = [8, 0], sizes = [8, 128], strides = [1, 1]} : vector<16x128xf32> to vector<8x128xf32>
    %cst_5 = arith.constant 2.000000e+00 : f32
    %17 = vector.broadcast %cst_5 : f32 to vector<8x128xf32>
    %18 = arith.subf %16, %17 : vector<8x128xf32>
    %cst_6 = arith.constant -1.000000e+00 : f32
    %19 = vector.broadcast %cst_6 : f32 to vector<8x128xf32>
    %20 = arith.mulf %19, %18 : vector<8x128xf32>
    %21 = arith.mulf %20, %18 : vector<8x128xf32>
    %22 = math.exp %21 : vector<8x128xf32>
    %cst_7 = arith.constant 2.000000e+00 : f32
    %23 = vector.broadcast %cst_7 : f32 to vector<8x128xf32>
    %24 = arith.cmpf olt, %16, %23 : vector<8x128xf32>
    %cst_8 = arith.constant 1.100000e+00 : f32
    %25 = vector.broadcast %cst_8 : f32 to vector<8x128xf32>
    %26 = arith.mulf %25, %22 : vector<8x128xf32>
    %cst_9 = arith.constant 1.000000e-01 : f32
    %27 = vector.broadcast %cst_9 : f32 to vector<8x128xf32>
    %28 = arith.mulf %27, %22 : vector<8x128xf32>
    %cst_10 = arith.constant 1.000000e+00 : f32
    %29 = vector.broadcast %cst_10 : f32 to vector<8x128xf32>
    %30 = arith.addf %29, %28 : vector<8x128xf32>
    %31 = arith.select %24, %26, %30 : vector<8x128xi1>, vector<8x128xf32>
    %32 = arith.mulf %15, %31 : vector<8x128xf32>
    %cst_11 = arith.constant 0.000000e+00 : f32
    %33 = vector.broadcast %cst_11 : f32 to vector<8x128xf32>
    %34 = arith.maximumf %16, %33 : vector<8x128xf32>
    %cst_12 = arith.constant 0.000000e+00 : f32
    %35 = vector.broadcast %cst_12 : f32 to vector<8x128xf32>
    %36 = arith.cmpf ogt, %34, %35 : vector<8x128xf32>
    %cst_13 = arith.constant 1.000000e+00 : f32
    %37 = vector.broadcast %cst_13 : f32 to vector<8x128xf32>
    %38 = arith.select %36, %34, %37 : vector<8x128xi1>, vector<8x128xf32>
    %39 = math.log %38 : vector<8x128xf32>
    %cst_14 = arith.constant 8.000000e-01 : f32
    %40 = vector.broadcast %cst_14 : f32 to vector<8x128xf32>
    %41 = arith.mulf %40, %39 : vector<8x128xf32>
    %42 = math.exp %41 : vector<8x128xf32>
    %cst_15 = arith.constant 0.000000e+00 : f32
    %43 = vector.broadcast %cst_15 : f32 to vector<8x128xf32>
    %44 = arith.select %36, %42, %43 : vector<8x128xi1>, vector<8x128xf32>
    %c0_16 = arith.constant 0 : index
    %c0_17 = arith.constant 0 : index
    %45 = vector.load %arg4[%c0_16, %c0_17] : memref<8x128xf32, #tpu.memory_space<vmem>>, vector<8x128xf32>
    tpu.vector_store %arg4[%c0_16, %c0_17], %32 {strides = array<i32>} : memref<8x128xf32, #tpu.memory_space<vmem>>, vector<8x128xf32>,
    %c0_18 = arith.constant 0 : index
    %c0_19 = arith.constant 0 : index
    %46 = vector.load %arg5[%c0_18, %c0_19] : memref<8x128xf32, #tpu.memory_space<vmem>>, vector<8x128xf32>
    tpu.vector_store %arg5[%c0_18, %c0_19], %44 {strides = array<i32>} : memref<8x128xf32, #tpu.memory_space<vmem>>, vector<8x128xf32>,
    %c0_20 = arith.constant 0 : index
    %c0_21 = arith.constant 0 : index
    %47 = vector.load %arg6[%c0_20, %c0_21] : memref<8x128xf32, #tpu.memory_space<vmem>>, vector<8x128xf32>
    tpu.vector_store %arg6[%c0_20, %c0_21], %15 {strides = array<i32>} : memref<8x128xf32, #tpu.memory_space<vmem>>, vector<8x128xf32>,
    %c0_22 = arith.constant 0 : index
    %c0_23 = arith.constant 0 : index
    %48 = vector.load %arg7[%c0_22, %c0_23] : memref<8x128xf32, #tpu.memory_space<vmem>>, vector<8x128xf32>
    tpu.vector_store %arg7[%c0_22, %c0_23], %31 {strides = array<i32>} : memref<8x128xf32, #tpu.memory_space<vmem>>, vector<8x128xf32>,
    return
  }
  func.func @transform_0(%arg0: i32) -> (i32, i32) {
    %c0_i32 = arith.constant 0 : i32
    %c0_i32_0 = arith.constant 0 : i32
    return %c0_i32, %arg0 : i32, i32
  }
  func.func @transform_1(%arg0: i32) -> (i32, i32) {
    %c1_i32 = arith.constant 1 : i32
    %0 = arith.addi %arg0, %c1_i32 : i32
    %c1_i32_0 = arith.constant 1 : i32
    %1 = arith.muli %0, %c1_i32_0 : i32
    %c0_i32 = arith.constant 0 : i32
    %c0_i32_1 = arith.constant 0 : i32
    return %c0_i32, %1 : i32, i32
  }
  func.func @transform_2(%arg0: i32) -> (i32, i32) {
    %c0_i32 = arith.constant 0 : i32
    %c0_i32_0 = arith.constant 0 : i32
    %c0_i32_1 = arith.constant 0 : i32
    return %c0_i32, %c0_i32_0 : i32, i32
  }
  func.func @transform_3(%arg0: i32) -> (i32, i32) {
    %c0_i32 = arith.constant 0 : i32
    %c0_i32_0 = arith.constant 0 : i32
    return %c0_i32, %arg0 : i32, i32
  }
  func.func @transform_4(%arg0: i32) -> (i32, i32) {
    %c0_i32 = arith.constant 0 : i32
    %c0_i32_0 = arith.constant 0 : i32
    return %c0_i32, %arg0 : i32, i32
  }
  func.func @transform_5(%arg0: i32) -> (i32, i32) {
    %c0_i32 = arith.constant 0 : i32
    %c0_i32_0 = arith.constant 0 : i32
    return %c0_i32, %arg0 : i32, i32
  }
  func.func @transform_6(%arg0: i32) -> (i32, i32) {
    %c0_i32 = arith.constant 0 : i32
    %c0_i32_0 = arith.constant 0 : i32
    return %c0_i32, %arg0 : i32, i32
  }
}

</mosaic_0001>

<llo_original>
// kernel: forward_attention_layer.1
$region0: #{forward_attention_layer.1}
  #allocation0 [shape = 'u32[]', space=smem, size = 0x4, offset = 0x4, fixed_abs, tag = 'smem constant byte address 0x4 - core index']
  #allocation1 [shape = 'u32[144,128]{1,0:T(1,128)}', space=vmem, size = 0x12000, scoped, tag = 'internal scratch']
  %s0 = inlined_call_operand.vmem [shape: f32[8,896], index: 0, kind: input, shape index: {}, may-alias: {0,1}]
  %s1 = inlined_call_operand.vmem [shape: f32[8,896], index: 1, kind: input, shape index: {}, may-alias: {0,1}]
  %s2 = inlined_call_operand.vmem [shape: f32[16,72], index: 2, kind: input, shape index: {}]
  %s3 = inlined_call_operand.vmem [shape: f32[8,768], index: 3, kind: output, shape index: {0}]
  %s4 = inlined_call_operand.vmem [shape: f32[8,768], index: 4, kind: output, shape index: {1}]
  %s5 = inlined_call_operand.vmem [shape: f32[8,768], index: 5, kind: output, shape index: {2}]
  %s6 = inlined_call_operand.vmem [shape: f32[8,768], index: 6, kind: output, shape index: {3}]
  %7 = xla_tuple %s3, %s4, %s5, %s6
  %s8 = sld [smem:[#allocation0]]
  $region69: #{forward_attention_layer.1} parent=0
    _
  %s10 = ssub.s32 1, %s8
  %s11 = scalar_select 0, %s10, %s8
  loop: start=0, step=1, limit=8
  $region2: #{forward_attention_layer.1} parent=0 // loop_pre_header
    _
  $region3: #{forward_attention_layer.1} parent=0 // loop_header
    %s13 = sphi 0, %s17
    %p14 = scmp.ge.s32.totalorder %s13, 8
    %s23 = sphi 0, %s25
    %s26 = sphi 0, %s23
    %s27 = sphi 0, %s26
    %s43 = sphi 0, %s27
    %s51 = sphi 0, %s53
    %s54 = sphi 0, %s51
    %s55 = sphi 0, %s54
    %s71 = sphi 0, %s55
    %s75 = sphi 0, %s75
    %s77 = sphi 0, %s75
    %s78 = sphi 0, %s77
    %s92 = sphi 0, %s78
    %s98 = sphi 0, %s100
    %s101 = sphi 0, %s98
    %s102 = sphi 0, %s101
    %s118 = sphi 0, %s102
    %s124 = sphi 0, %s126
    %s127 = sphi 0, %s124
    %s128 = sphi 0, %s127
    %s144 = sphi 0, %s128
    %s150 = sphi 0, %s152
    %s153 = sphi 0, %s150
    %s154 = sphi 0, %s153
    %s170 = sphi 0, %s154
    %s176 = sphi 0, %s178
    %s179 = sphi 0, %s176
    %s180 = sphi 0, %s179
    %s196 = sphi 0, %s180
  $region4: #{forward_attention_layer.1} parent=0 // loop_header_branch
    %16 = sbr.rel (%p14) target = $region8
  $region5: #{forward_attention_layer.1} parent=0 // loop_body
    %s18 = ssub.s32 %s13, 1
    %s19 = ssub.s32 %s13, 2
    %s20 = sadd.s32 %s13, 1
    %s21 = ssub.s32 %s13, %s20
    %p22 = scmp.eq.s32.totalorder %s21, 0
    %s24 = sadd.s32 %s23, 1
    %s25 = scalar_select %p22, %s23, %s24
    %p28 = pneg %p22
    %p29 = scmp.eq.s32.totalorder %s13, 5
    %p30 = por %p28, %p29
    %p31 = scmp.ne.s32.totalorder %s23, %s26
    %p32 = scmp.eq.s32.totalorder %s13, 0
    %p33 = por %p31, %p32
    %p34 = scmp.ne.s32.totalorder %s23, %s26
    %p35 = scmp.eq.s32.totalorder %s18, 5
    %p36 = por %p34, %p35
    %p37 = scmp.ne.s32.totalorder %s26, %s27
    %p38 = scmp.eq.s32.totalorder %s18, 0
    %p39 = por %p37, %p38
    %p40 = scmp.ne.s32.totalorder %s26, %s27
    %p41 = scmp.eq.s32.totalorder %s19, 5
    %p42 = por %p40, %p41
    %p44 = scmp.ne.s32.totalorder %s27, %s43
    %p45 = scmp.eq.s32.totalorder %s19, 0
    %p46 = por %p44, %p45
    %s47 = sadd.s32 %s13, 1
    %s48 = sadd.s32 %s20, 1
    %s49 = ssub.s32 %s47, %s48
    %p50 = scmp.eq.s32.totalorder %s49, 0
    %s52 = sadd.s32 %s51, 1
    %s53 = scalar_select %p50, %s51, %s52
    %p56 = pneg %p50
    %p57 = scmp.eq.s32.totalorder %s13, 5
    %p58 = por %p56, %p57
    %p59 = scmp.ne.s32.totalorder %s51, %s54
    %p60 = scmp.eq.s32.totalorder %s13, 0
    %p61 = por %p59, %p60
    %p62 = scmp.ne.s32.totalorder %s51, %s54
    %p63 = scmp.eq.s32.totalorder %s18, 5
    %p64 = por %p62, %p63
    %p65 = scmp.ne.s32.totalorder %s54, %s55
    %p66 = scmp.eq.s32.totalorder %s18, 0
    %p67 = por %p65, %p66
    %p68 = scmp.ne.s32.totalorder %s54, %s55
    %p69 = scmp.eq.s32.totalorder %s19, 5
    %p70 = por %p68, %p69
    %p72 = scmp.ne.s32.totalorder %s55, %s71
    %p73 = scmp.eq.s32.totalorder %s19, 0
    %p74 = por %p72, %p73
    %s76 = sadd.s32 %s75, 1
    %p79 = scmp.eq.s32.totalorder %s13, 5
    %p80 = scmp.ne.s32.totalorder %s75, %s77
    %p81 = scmp.eq.s32.totalorder %s13, 0
    %p82 = por %p80, %p81
    %p83 = scmp.ne.s32.totalorder %s75, %s77
    %p84 = scmp.eq.s32.totalorder %s18, 5
    %p85 = por %p83, %p84
    %p86 = scmp.ne.s32.totalorder %s77, %s78
    %p87 = scmp.eq.s32.totalorder %s18, 0
    %p88 = por %p86, %p87
    %p89 = scmp.ne.s32.totalorder %s77, %s78
    %p90 = scmp.eq.s32.totalorder %s19, 5
    %p91 = por %p89, %p90
    %p93 = scmp.ne.s32.totalorder %s78, %s92
    %p94 = scmp.eq.s32.totalorder %s19, 0
    %p95 = por %p93, %p94
    %s96 = ssub.s32 %s13, %s20
    %p97 = scmp.eq.s32.totalorder %s96, 0
    %s99 = sadd.s32 %s98, 1
    %s100 = scalar_select %p97, %s98, %s99
    %p103 = pneg %p97
    %p104 = scmp.eq.s32.totalorder %s13, 5
    %p105 = por %p103, %p104
    %p106 = scmp.ne.s32.totalorder %s98, %s101
    %p107 = scmp.eq.s32.totalorder %s13, 0
    %p108 = por %p106, %p107
    %p109 = scmp.ne.s32.totalorder %s98, %s101
    %p110 = scmp.eq.s32.totalorder %s18, 5
    %p111 = por %p109, %p110
    %p112 = scmp.ne.s32.totalorder %s101, %s102
    %p113 = scmp.eq.s32.totalorder %s18, 0
    %p114 = por %p112, %p113
    %p115 = scmp.ne.s32.totalorder %s101, %s102
    %p116 = scmp.eq.s32.totalorder %s19, 5
    %p117 = por %p115, %p116
    %p119 = scmp.ne.s32.totalorder %s102, %s118
    %p120 = scmp.eq.s32.totalorder %s19, 0
    %p121 = por %p119, %p120
    %s122 = ssub.s32 %s13, %s20
    %p123 = scmp.eq.s32.totalorder %s122, 0
    %s125 = sadd.s32 %s124, 1
    %s126 = scalar_select %p123, %s124, %s125
    %p129 = pneg %p123
    %p130 = scmp.eq.s32.totalorder %s13, 5
    %p131 = por %p129, %p130
    %p132 = scmp.ne.s32.totalorder %s124, %s127
    %p133 = scmp.eq.s32.totalorder %s13, 0
    %p134 = por %p132, %p133
    %p135 = scmp.ne.s32.totalorder %s124, %s127
    %p136 = scmp.eq.s32.totalorder %s18, 5
    %p137 = por %p135, %p136
    %p138 = scmp.ne.s32.totalorder %s127, %s128
    %p139 = scmp.eq.s32.totalorder %s18, 0
    %p140 = por %p138, %p139
    %p141 = scmp.ne.s32.totalorder %s127, %s128
    %p142 = scmp.eq.s32.totalorder %s19, 5
    %p143 = por %p141, %p142
    %p145 = scmp.ne.s32.totalorder %s128, %s144
    %p146 = scmp.eq.s32.totalorder %s19, 0
    %p147 = por %p145, %p146
    %s148 = ssub.s32 %s13, %s20
    %p149 = scmp.eq.s32.totalorder %s148, 0
    %s151 = sadd.s32 %s150, 1
    %s152 = scalar_select %p149, %s150, %s151
    %p155 = pneg %p149
    %p156 = scmp.eq.s32.totalorder %s13, 5
    %p157 = por %p155, %p156
    %p158 = scmp.ne.s32.totalorder %s150, %s153
    %p159 = scmp.eq.s32.totalorder %s13, 0
    %p160 = por %p158, %p159
    %p161 = scmp.ne.s32.totalorder %s150, %s153
    %p162 = scmp.eq.s32.totalorder %s18, 5
    %p163 = por %p161, %p162
    %p164 = scmp.ne.s32.totalorder %s153, %s154
    %p165 = scmp.eq.s32.totalorder %s18, 0
    %p166 = por %p164, %p165
    %p167 = scmp.ne.s32.totalorder %s153, %s154
    %p168 = scmp.eq.s32.totalorder %s19, 5
    %p169 = por %p167, %p168
    %p171 = scmp.ne.s32.totalorder %s154, %s170
    %p172 = scmp.eq.s32.totalorder %s19, 0
    %p173 = por %p171, %p172
    %s174 = ssub.s32 %s13, %s20
    %p175 = scmp.eq.s32.totalorder %s174, 0
    %s177 = sadd.s32 %s176, 1
    %s178 = scalar_select %p175, %s176, %s177
    %p181 = pneg %p175
    %p182 = scmp.eq.s32.totalorder %s13, 5
    %p183 = por %p181, %p182
    %p184 = scmp.ne.s32.totalorder %s176, %s179
    %p185 = scmp.eq.s32.totalorder %s13, 0
    %p186 = por %p184, %p185
    %p187 = scmp.ne.s32.totalorder %s176, %s179
    %p188 = scmp.eq.s32.totalorder %s18, 5
    %p189 = por %p187, %p188
    %p190 = scmp.ne.s32.totalorder %s179, %s180
    %p191 = scmp.eq.s32.totalorder %s18, 0
    %p192 = por %p190, %p191
    %p193 = scmp.ne.s32.totalorder %s179, %s180
    %p194 = scmp.eq.s32.totalorder %s19, 5
    %p195 = por %p193, %p194
    %p197 = scmp.ne.s32.totalorder %s180, %s196
    %p198 = scmp.eq.s32.totalorder %s19, 0
    %p199 = por %p197, %p198
    %p200 = scmp.le.s32.totalorder 1, %s13
    %p201 = scmp.lt.s32.totalorder %s13, 7
    %p202 = pnand %p200, %p201
    %p203 = pneg %p202
    // Predicated region
    $region9: #{forward_attention_layer.1} parent=5 // pred_check
      _
    $region10: #{forward_attention_layer.1} parent=5 // pred_check_branch
      %205 = sbr.rel (%p202) target = $region12
    $region11: #{forward_attention_layer.1} parent=5 // pred_region
      %s206 = ssub.s32 %s13, 1
      // Predicated region
      $region13: #{forward_attention_layer.1} parent=11 // pred_check
        %p207 = pneg %p88
      $region14: #{forward_attention_layer.1} parent=11 // pred_check_branch
        %209 = sbr.rel (%p207) target = $region16
      $region15: #{forward_attention_layer.1} parent=11 // pred_region
        _
      $region16: #{forward_attention_layer.1} parent=11 // pred_fallthru
        _
    $region12: #{forward_attention_layer.1} parent=5 // pred_fallthru
      _
    %p210 = scmp.lt.s32.totalorder %s13, 6
    // Predicated region
    $region17: #{forward_attention_layer.1} parent=5 // pred_check
      %p211 = pneg %p210
    $region18: #{forward_attention_layer.1} parent=5 // pred_check_branch
      %213 = sbr.rel (%p211) target = $region20
    $region19: #{forward_attention_layer.1} parent=5 // pred_region
      // Predicated region
      $region21: #{forward_attention_layer.1} parent=19 // pred_check
        %p214 = pneg %p33
      $region22: #{forward_attention_layer.1} parent=19 // pred_check_branch
        %216 = sbr.rel (%p214) target = $region24
      $region23: #{forward_attention_layer.1} parent=19 // pred_region
        %p217 = scmp.lt.s32.totalorder %s13, 6
        %s218 = scalar_select %p217, %s13, 6
        %s219 = smul.addr %s218, 8
        %s220 = scalar_lea.vmem %s0, %s219
      $region24: #{forward_attention_layer.1} parent=19 // pred_fallthru
        _
      // Predicated region
      $region25: #{forward_attention_layer.1} parent=19 // pred_check
        %p221 = pneg %p61
      $region26: #{forward_attention_layer.1} parent=19 // pred_check_branch
        %223 = sbr.rel (%p221) target = $region28
      $region27: #{forward_attention_layer.1} parent=19 // pred_region
        %s224 = sadd.s32 %s13, 1
        %p225 = scmp.lt.s32.totalorder %s224, 6
        %s226 = scalar_select %p225, %s224, 6
        %s227 = smul.addr %s226, 8
        %s228 = scalar_lea.vmem %s1, %s227
        %s229 = sadd.s32 %s13, 1
      $region28: #{forward_attention_layer.1} parent=19 // pred_fallthru
        _
    $region20: #{forward_attention_layer.1} parent=5 // pred_fallthru
      _
    %p230 = scmp.le.s32.totalorder 1, %s13
    %p231 = scmp.lt.s32.totalorder %s13, 7
    %p232 = pnand %p230, %p231
    %p233 = pneg %p232
    // Predicated region
    $region29: #{forward_attention_layer.1} parent=5 // pred_check
      _
    $region30: #{forward_attention_layer.1} parent=5 // pred_check_branch
      %235 = sbr.rel (%p232) target = $region32
    $region31: #{forward_attention_layer.1} parent=5 // pred_region
      %s236 = ssub.s32 %s13, 1
      %p237 = scmp.lt.s32.totalorder %s18, 6
      %s238 = scalar_select %p237, %s18, 6
      %s239 = smul.addr %s238, 8
      %s240 = scalar_lea.vmem %s0, %s239
      %p241 = pneg %p39
      %p242 = pneg %p36
      %s243 = sadd.s32 %s18, 1
      %p244 = scmp.lt.s32.totalorder %s243, 6
      %s245 = scalar_select %p244, %s243, 6
      %s246 = smul.addr %s245, 8
      %s247 = scalar_lea.vmem %s1, %s246
      %p248 = pneg %p67
      %p249 = pneg %p64
      %p250 = pneg %p88
      %p251 = pneg %p85
      %p252 = pneg %p114
      %p253 = pneg %p111
      %p254 = scmp.lt.s32.totalorder %s18, 5
      %s255 = scalar_select %p254, %s18, 5
      %s256 = smul.addr %s255, 8
      %s257 = scalar_lea.vmem %s3, %s256
      %p258 = pneg %p140
      %p259 = pneg %p137
      %p260 = scmp.lt.s32.totalorder %s18, 5
      %s261 = scalar_select %p260, %s18, 5
      %s262 = smul.addr %s261, 8
      %s263 = scalar_lea.vmem %s4, %s262
      %p264 = pneg %p166
      %p265 = pneg %p163
      %p266 = scmp.lt.s32.totalorder %s18, 5
      %s267 = scalar_select %p266, %s18, 5
      %s268 = smul.addr %s267, 8
      %s269 = scalar_lea.vmem %s5, %s268
      %p270 = pneg %p192
      %p271 = pneg %p189
      %p272 = scmp.lt.s32.totalorder %s18, 5
      %s273 = scalar_select %p272, %s18, 5
      %s274 = smul.addr %s273, 8
      %s275 = scalar_lea.vmem %s6, %s274
      %p276 = scmp.lt.s32.totalorder %s18, 6
      %s277 = scalar_select %p276, %s18, 6
      %s278 = smul.addr %s277, 8
      %s279 = scalar_lea.vmem %s0, %s278
      %s280 = sadd.s32 %s18, 1
      %p281 = scmp.lt.s32.totalorder %s280, 6
      %s282 = scalar_select %p281, %s280, 6
      %s283 = smul.addr %s282, 8
      %s284 = scalar_lea.vmem %s1, %s283
      %s285 = sadd.s32 %s18, 1
      %p286 = scmp.lt.s32.totalorder %s18, 5
      %s287 = scalar_select %p286, %s18, 5
      %s288 = smul.addr %s287, 8
      %s289 = scalar_lea.vmem %s3, %s288
      %p290 = scmp.lt.s32.totalorder %s18, 5
      %s291 = scalar_select %p290, %s18, 5
      %s292 = smul.addr %s291, 8
      %s293 = scalar_lea.vmem %s4, %s292
      %p294 = scmp.lt.s32.totalorder %s18, 5
      %s295 = scalar_select %p294, %s18, 5
      %s296 = smul.addr %s295, 8
      %s297 = scalar_lea.vmem %s5, %s296
      %p298 = scmp.lt.s32.totalorder %s18, 5
      %s299 = scalar_select %p298, %s18, 5
      %s300 = smul.addr %s299, 8
      %s301 = scalar_lea.vmem %s6, %s300
      %v302 = vld [vmem:[%s279] sm:$0xff]
      %v303 = vld [vmem:[%s284] sm:$0xff]
      %306 = vrot.lane.b32.xlu0 %v302, 127
      %v307 = vpop.permute.xlu0 %306
      %308 = vrot.lane.b32.xlu0 %v303, 127
      %v309 = vpop.permute.xlu0 %308
      %vm310 = vcmask 1039360
      %v311 = vsel %vm310, %v307, %v309
      %313 = vrot.lane.b32.xlu0 %v302, 126
      %v314 = vpop.permute.xlu0 %313
      %315 = vrot.lane.b32.xlu0 %v303, 126
      %v316 = vpop.permute.xlu0 %315
      %vm317 = vcmask 1031168
      %v318 = vsel %vm317, %v314, %v316
      %320 = vrot.lane.b32.xlu0 %v302, 110
      %v321 = vpop.permute.xlu0 %320
      %322 = vrot.lane.b32.xlu0 %v303, 110
      %v323 = vpop.permute.xlu0 %322
      %vm324 = vcmask 900096
      %v325 = vsel %vm324, %v321, %v323
      %327 = vrot.lane.b32.xlu0 %v302, 109
      %v328 = vpop.permute.xlu0 %327
      %329 = vrot.lane.b32.xlu0 %v303, 109
      %v330 = vpop.permute.xlu0 %329
      %vm331 = vcmask 891904
      %v332 = vsel %vm331, %v328, %v330
      %334 = vrot.lane.b32.xlu0 %v302, 108
      %v335 = vpop.permute.xlu0 %334
      %336 = vrot.lane.b32.xlu0 %v303, 108
      %v337 = vpop.permute.xlu0 %336
      %vm338 = vcmask 883712
      %v339 = vsel %vm338, %v335, %v337
      %341 = vrot.lane.b32.xlu0 %v302, 92
      %v342 = vpop.permute.xlu0 %341
      %343 = vrot.lane.b32.xlu0 %v303, 92
      %v344 = vpop.permute.xlu0 %343
      %vm345 = vcmask 752640
      %v346 = vsel %vm345, %v342, %v344
      %348 = vrot.lane.b32.xlu0 %v302, 91
      %v349 = vpop.permute.xlu0 %348
      %350 = vrot.lane.b32.xlu0 %v303, 91
      %v351 = vpop.permute.xlu0 %350
      %vm352 = vcmask 744448
      %v353 = vsel %vm352, %v349, %v351
      %355 = vrot.lane.b32.xlu0 %v302, 90
      %v356 = vpop.permute.xlu0 %355
      %357 = vrot.lane.b32.xlu0 %v303, 90
      %v358 = vpop.permute.xlu0 %357
      %vm359 = vcmask 736256
      %v360 = vsel %vm359, %v356, %v358
      %v362 = vld [vmem:[%s2] sm:$0xff]
      %v363 = vld [vmem:[%s2 + $0x8] sm:$0xff]
      %vm364 = vcmask 588800
      %v366 = vsel %vm364, %v362, 0
      %v369 = vsel %vm364, %v363, 0
      %371 = vmatprep.subr.mxu0 0.0
      %372 = vmatpush1.msra.mxu0 0.0
      %373 = vmatprep.subr.mxu0 0.0
      %374 = vmatpush1.msra.mxu0 0.0
      %375 = vmatprep.subr.mxu0 0.0
      %376 = vmatpush1.msra.mxu0 0.0
      %377 = vmatprep.subr.mxu0 0.0
      %378 = vmatpush1.msra.mxu0 0.0
      %379 = vmatprep.subr.mxu0 0.0
      %380 = vmatpush1.msra.mxu0 0.0
      %381 = vmatprep.subr.mxu0 0.0
      %382 = vmatpush1.msra.mxu0 0.0
      %383 = vmatprep.subr.mxu0 0.0
      %384 = vmatpush1.msra.mxu0 0.0
      %385 = vmatprep.subr.mxu0 0.0
      %386 = vmatpush1.msra.mxu0 %v360
      %387 = vmatprep.subr.mxu0 0.0
      %388 = vmatpush1.msra.mxu0 %v353
      %389 = vmatprep.subr.mxu0 0.0
      %390 = vmatpush1.msra.mxu0 %v346
      %391 = vmatprep.subr.mxu0 0.0
      %392 = vmatpush1.msra.mxu0 %v339
      %393 = vmatprep.subr.mxu0 0.0
      %394 = vmatpush1.msra.mxu0 %v332
      %395 = vmatprep.subr.mxu0 0.0
      %396 = vmatpush1.msra.mxu0 %v325
      %397 = vmatprep.subr.mxu0 0.0
      %398 = vmatpush1.msra.mxu0 %v318
      %399 = vmatprep.subr.mxu0 0.0
      %400 = vmatpush1.msra.mxu0 %v311
      %401 = vmatprep.subr.mxu0 0.0
      %402 = vmatpush1.msra.mxu0 %v302
      %403 = vmatprep.subr.mxu0 0.0
      %404 = vmatpush2.msra.mxu0 0.0
      %405 = vmatprep.subr.mxu0 0.0
      %406 = vmatpush2.msra.mxu0 0.0
      %407 = vmatprep.subr.mxu0 0.0
      %408 = vmatpush2.msra.mxu0 0.0
      %409 = vmatprep.subr.mxu0 0.0
      %410 = vmatpush2.msra.mxu0 0.0
      %411 = vmatprep.subr.mxu0 0.0
      %412 = vmatpush2.msra.mxu0 0.0
      %413 = vmatprep.subr.mxu0 0.0
      %414 = vmatpush2.msra.mxu0 0.0
      %415 = vmatprep.subr.mxu0 0.0
      %416 = vmatpush2.msra.mxu0 0.0
      %417 = vmatprep.subr.mxu0 0.0
      %418 = vmatpush2.msra.mxu0 0.0
      %419 = vmatprep.subr.mxu0 0.0
      %420 = vmatpush2.msra.mxu0 0.0
      %421 = vmatprep.subr.mxu0 0.0
      %422 = vmatpush2.msra.mxu0 0.0
      %423 = vmatprep.subr.mxu0 0.0
      %424 = vmatpush2.msra.mxu0 0.0
      %425 = vmatprep.subr.mxu0 0.0
      %426 = vmatpush2.msra.mxu0 0.0
      %427 = vmatprep.subr.mxu0 0.0
      %428 = vmatpush2.msra.mxu0 0.0
      %429 = vmatprep.subr.mxu0 0.0
      %430 = vmatpush2.msra.mxu0 0.0
      %431 = vmatprep.subr.mxu0 0.0
      %432 = vmatpush2.msra.mxu0 0.0
      %433 = vmatprep.subr.mxu0 0.0
      %434 = vmatpush2.msra.mxu0 0.0
      %435 = vmatprep.mubr.f32.mxu0 0.0
      %436 = vmatmul.mubr.f32.gmra.mxu0 %v366
      %v437 = vpop.f32.mrf.mxu0
      %v438 = vadd.f32 0.0, %v437
      %v439 = vpop.f32.mrf.mxu0
      %440 = vmatprep.mubr.f32.mxu0 0.0
      %441 = vmatmul.mubr.f32.gmra.mxu0 %v369
      %v442 = vpop.f32.mrf.mxu0
      %v443 = vadd.f32 0.0, %v442
      %v444 = vpop.f32.mrf.mxu0
      %445 = vdwg.mxu0
      %v446 = vsub.f32 %v443, 2.0
      %v447 = vmul.f32 %v446, -1.0
      %v448 = vmul.f32 %v447, %v446
      %v449 = vmul.f32 %v448, 1.442695
      %v450 = vpow.pop %v449
      %vm451 = vcmp.lt.f32.partialorder %v443, 2.0
      %v452 = vmul.f32 %v450, 1.1
      %v453 = vmul.f32 %v450, 0.1
      %v454 = vadd.f32 %v453, 1.0
      %v455 = vsel %vm451, %v452, %v454
      %v456 = vmul.f32 %v438, %v455
      %v457 = vmax.f32 %v443, 0.0
      %vm458 = vcmp.gt.f32.partialorder %v457, 0.0
      %v459 = vsel %vm458, %v457, 1.0
      %v460 = vlog2.pop %v459
      %v461 = vmul.f32 %v460, 0.6931472
      %v462 = vmul.f32 %v461, 0.8
      %v463 = vmul.f32 %v462, 1.442695
      %v464 = vpow.pop %v463
      %v465 = vsel %vm458, %v464, 0.0
      %466 = vst [vmem:[%s289] sm:$0xff] %v456
      %467 = vst [vmem:[%s293] sm:$0xff] %v465
      %468 = vst [vmem:[%s297] sm:$0xff] %v438
      %469 = vst [vmem:[%s301] sm:$0xff] %v455
      %p470 = scmp.lt.s32.totalorder %s18, 5
      %s471 = scalar_select %p470, %s18, 5
      %s472 = smul.addr %s471, 8
      %s473 = scalar_lea.vmem %s3, %s472
      %p474 = scmp.lt.s32.totalorder %s18, 5
      %s475 = scalar_select %p474, %s18, 5
      %s476 = smul.addr %s475, 8
      %s477 = scalar_lea.vmem %s4, %s476
      %p478 = scmp.lt.s32.totalorder %s18, 5
      %s479 = scalar_select %p478, %s18, 5
      %s480 = smul.addr %s479, 8
      %s481 = scalar_lea.vmem %s5, %s480
      %p482 = scmp.lt.s32.totalorder %s18, 5
      %s483 = scalar_select %p482, %s18, 5
      %s484 = smul.addr %s483, 8
      %s485 = scalar_lea.vmem %s6, %s484
      // Predicated region
      $region33: #{forward_attention_layer.1} parent=31 // pred_check
        %p486 = pneg %p111
      $region34: #{forward_attention_layer.1} parent=31 // pred_check_branch
        %488 = sbr.rel (%p486) target = $region36
      $region35: #{forward_attention_layer.1} parent=31 // pred_region
        _
      $region36: #{forward_attention_layer.1} parent=31 // pred_fallthru
        _
      // Predicated region
      $region37: #{forward_attention_layer.1} parent=31 // pred_check
        %p489 = pneg %p137
      $region38: #{forward_attention_layer.1} parent=31 // pred_check_branch
        %491 = sbr.rel (%p489) target = $region40
      $region39: #{forward_attention_layer.1} parent=31 // pred_region
        _
      $region40: #{forward_attention_layer.1} parent=31 // pred_fallthru
        _
      // Predicated region
      $region41: #{forward_attention_layer.1} parent=31 // pred_check
        %p492 = pneg %p163
      $region42: #{forward_attention_layer.1} parent=31 // pred_check_branch
        %494 = sbr.rel (%p492) target = $region44
      $region43: #{forward_attention_layer.1} parent=31 // pred_region
        _
      $region44: #{forward_attention_layer.1} parent=31 // pred_fallthru
        _
      // Predicated region
      $region45: #{forward_attention_layer.1} parent=31 // pred_check
        %p495 = pneg %p189
      $region46: #{forward_attention_layer.1} parent=31 // pred_check_branch
        %497 = sbr.rel (%p495) target = $region48
      $region47: #{forward_attention_layer.1} parent=31 // pred_region
        _
      $region48: #{forward_attention_layer.1} parent=31 // pred_fallthru
        _
    $region32: #{forward_attention_layer.1} parent=5 // pred_fallthru
      _
    %p498 = scmp.le.s32.totalorder 2, %s13
    // Predicated region
    $region49: #{forward_attention_layer.1} parent=5 // pred_check
      %p499 = pneg %p498
    $region50: #{forward_attention_layer.1} parent=5 // pred_check_branch
      %501 = sbr.rel (%p499) target = $region52
    $region51: #{forward_attention_layer.1} parent=5 // pred_region
      %s502 = ssub.s32 %s13, 2
      // Predicated region
      $region53: #{forward_attention_layer.1} parent=51 // pred_check
        %p503 = pneg %p117
      $region54: #{forward_attention_layer.1} parent=51 // pred_check_branch
        %505 = sbr.rel (%p503) target = $region56
      $region55: #{forward_attention_layer.1} parent=51 // pred_region
        %p506 = scmp.lt.s32.totalorder %s19, 5
        %s507 = scalar_select %p506, %s19, 5
        %s508 = smul.addr %s507, 8
        %s509 = scalar_lea.vmem %s3, %s508
      $region56: #{forward_attention_layer.1} parent=51 // pred_fallthru
        _
      // Predicated region
      $region57: #{forward_attention_layer.1} parent=51 // pred_check
        %p510 = pneg %p143
      $region58: #{forward_attention_layer.1} parent=51 // pred_check_branch
        %512 = sbr.rel (%p510) target = $region60
      $region59: #{forward_attention_layer.1} parent=51 // pred_region
        %p513 = scmp.lt.s32.totalorder %s19, 5
        %s514 = scalar_select %p513, %s19, 5
        %s515 = smul.addr %s514, 8
        %s516 = scalar_lea.vmem %s4, %s515
      $region60: #{forward_attention_layer.1} parent=51 // pred_fallthru
        _
      // Predicated region
      $region61: #{forward_attention_layer.1} parent=51 // pred_check
        %p517 = pneg %p169
      $region62: #{forward_attention_layer.1} parent=51 // pred_check_branch
        %519 = sbr.rel (%p517) target = $region64
      $region63: #{forward_attention_layer.1} parent=51 // pred_region
        %p520 = scmp.lt.s32.totalorder %s19, 5
        %s521 = scalar_select %p520, %s19, 5
        %s522 = smul.addr %s521, 8
        %s523 = scalar_lea.vmem %s5, %s522
      $region64: #{forward_attention_layer.1} parent=51 // pred_fallthru
        _
      // Predicated region
      $region65: #{forward_attention_layer.1} parent=51 // pred_check
        %p524 = pneg %p195
      $region66: #{forward_attention_layer.1} parent=51 // pred_check_branch
        %526 = sbr.rel (%p524) target = $region68
      $region67: #{forward_attention_layer.1} parent=51 // pred_region
        %p527 = scmp.lt.s32.totalorder %s19, 5
        %s528 = scalar_select %p527, %s19, 5
        %s529 = smul.addr %s528, 8
        %s530 = scalar_lea.vmem %s6, %s529
      $region68: #{forward_attention_layer.1} parent=51 // pred_fallthru
        _
    $region52: #{forward_attention_layer.1} parent=5 // pred_fallthru
      _
  $region6: #{forward_attention_layer.1} parent=0 // loop_footer
    %s17 = sadd.s32 1, %s13
  $region7: #{forward_attention_layer.1} parent=0 // loop_footer_branch
    %12 = sbr.rel target = $region3
  $region8: #{forward_attention_layer.1} parent=0 // loop_exit
    _

</llo_original>
